<compile_context>
chip_gen: v6e
topology: v6e:2x2x1
jax: 0.10.0
libtpu: 0.0.40
codegen_flags: <defaults>
</compile_context>

<pallas_src>
import math

import jax
import jax.numpy as jnp
from jax.experimental import pallas as pl
from jax.experimental.pallas import tpu as pltpu

IN_F, H1, H2, OUT_F = 85, 128, 64, 2
OUT_PAD = 8              # logits padded 2 -> 8 columns (full last dim of the output array)
BN_EPS = 1e-5
DEFAULT_TILE_M = 2048    # rows per grid step for large batches


def mlp_kernel(x_ref,
               w1_ref, c1_ref,
               w2_ref, c2_ref,
               w3_ref, c3_ref,
               o_ref):
    # f32 HBM tile -> bf16 in VMEM (in-kernel cast; avoids an extra HBM pass in the wrapper).
    x = x_ref[...].astype(jnp.bfloat16)

    # Layer 1: Linear(85 -> 128) with BN folded into W / shift, then ReLU.
    h = jnp.dot(x, w1_ref[...], preferred_element_type=jnp.float32)
    h = jnp.maximum(h + c1_ref[...], 0.0).astype(jnp.bfloat16)

    # Layer 2: Linear(128 -> 64) with BN folded, then ReLU.
    h = jnp.dot(h, w2_ref[...], preferred_element_type=jnp.float32)
    h = jnp.maximum(h + c2_ref[...], 0.0).astype(jnp.bfloat16)

    # Layer 3: Linear(64 -> 2), zero-padded to 8 output lanes (tiny store).
    out = jnp.dot(h, w3_ref[...], preferred_element_type=jnp.float32) + c3_ref[...]
    o_ref[...] = out.astype(o_ref.dtype)


def _fold_bn(w, b, gamma, beta, mean, var):
    """Fold eval-mode BatchNorm1d into the preceding Linear: y = x @ (w*s) + (b*s + beta - mean*s)."""
    s = gamma * jax.lax.rsqrt(var + BN_EPS)
    return w * s[None, :], b * s + (beta - mean * s)


def _round_up(a, b):
    return (a + b - 1) // b * b


def neural_network_forward(x, params):
    (w1, b1, g1, be1, m1, v1,
     w2, b2, g2, be2, m2, v2,
     w3, b3) = params
    n = x.shape[0]

    # Fold BN into weights (general running stats, not just fresh-init ones).
    # NOTE: folded weights are cast to bf16; with pathologically tiny running_var
    # the gamma*rsqrt(var) scale can make bf16 rounding visible (keep f32 if needed).
    w1f, c1 = _fold_bn(w1, b1, g1, be1, m1, v1)
    w2f, c2 = _fold_bn(w2, b2, g2, be2, m2, v2)

    # Pad the last Linear only to 8 output columns (zeros): tiny store, legal block.
    w3p = jnp.zeros((H2, OUT_PAD), jnp.float32).at[:, :OUT_F].set(w3)
    c3p = jnp.zeros((OUT_PAD,), jnp.float32).at[:OUT_F].set(b3)

    # bf16 MXU weights; shift constants stay f32; x stays f32 (cast happens in-kernel).
    xf = x.astype(jnp.float32)
    w1b = w1f.astype(jnp.bfloat16)
    w2b = w2f.astype(jnp.bfloat16)
    w3b = w3p.astype(jnp.bfloat16)
    c1r = c1.reshape(1, H1).astype(jnp.float32)
    c2r = c2.reshape(1, H2).astype(jnp.float32)
    c3r = c3p.reshape(1, OUT_PAD).astype(jnp.float32)

    # Batch tiling: no padding copy. Single full-extent block for tiny batches;
    # otherwise at least 2 (even) steps (v7x megacore) of <= DEFAULT_TILE_M rows,
    # with a possibly-partial last block handled by Pallas.
    if n <= 8:
        tile_m = n                      # block == full dim -> legal for any n
    else:
        num_tiles = max(2, _round_up(pl.cdiv(n, DEFAULT_TILE_M), 2))
        tile_m = _round_up(pl.cdiv(n, num_tiles), 8)
    grid_m = pl.cdiv(n, tile_m)

    const2 = lambda i: (0, 0)   # weights/shifts: same block every step -> stay resident

    weight_bytes = 2 * (IN_F * H1 + H1 * H2 + H2 * OUT_PAD) + 4 * (H1 + H2 + OUT_PAD)
    cost = pl.CostEstimate(
        flops=2 * n * (IN_F * H1 + H1 * H2 + H2 * OUT_PAD),
        transcendentals=0,
        bytes_accessed=n * IN_F * 4 + n * OUT_PAD * 4 + weight_bytes,
    )

    out = pl.pallas_call(
        mlp_kernel,
        out_shape=jax.ShapeDtypeStruct((n, OUT_PAD), jnp.float32),
        grid=(grid_m,),
        in_specs=[
            pl.BlockSpec((tile_m, IN_F), lambda i: (i, 0)),   # x tile, pipelined over batch
            pl.BlockSpec((IN_F, H1), const2),
            pl.BlockSpec((1, H1), const2),
            pl.BlockSpec((H1, H2), const2),
            pl.BlockSpec((1, H2), const2),
            pl.BlockSpec((H2, OUT_PAD), const2),
            pl.BlockSpec((1, OUT_PAD), const2),
        ],
        out_specs=pl.BlockSpec((tile_m, OUT_PAD), lambda i: (i, 0)),
        compiler_params=pltpu.CompilerParams(
            dimension_semantics=("parallel",),     # v7x: shard batch tiles across 2 TCs
            vmem_limit_bytes=32 * 1024 * 1024),    # headroom on v5e's 16 MiB scoped default
        cost_estimate=cost,
    )(xf, w1b, c1r, w2b, c2r, w3b, c3r)

    return out[:, :OUT_F]


def reference_forward(x, params):
    """Pure-JAX f32 reference of the eval-mode PyTorch module."""
    (w1, b1, g1, be1, m1, v1,
     w2, b2, g2, be2, m2, v2,
     w3, b3) = params
    h = x @ w1 + b1
    h = (h - m1) * (g1 / jnp.sqrt(v1 + BN_EPS)) + be1
    h = jnp.maximum(h, 0.0)
    h = h @ w2 + b2
    h = (h - m2) * (g2 / jnp.sqrt(v2 + BN_EPS)) + be2
    h = jnp.maximum(h, 0.0)
    return h @ w3 + b3


def init_params(key):
    """PyTorch-default-style init: Linear ~ U(+/-1/sqrt(fan_in)); BN gamma=1, beta=0, mean=0, var=1."""
    ks = jax.random.split(key, 6)

    def linear(kw, kb, fan_in, fan_out):
        bound = 1.0 / math.sqrt(fan_in)
        # Stored (fan_in, fan_out) so the kernel computes x @ W directly.
        w = jax.random.uniform(kw, (fan_in, fan_out), jnp.float32, -bound, bound)
        b = jax.random.uniform(kb, (fan_out,), jnp.float32, -bound, bound)
        return w, b

    w1, b1 = linear(ks[0], ks[1], IN_F, H1)
    w2, b2 = linear(ks[2], ks[3], H1, H2)
    w3, b3 = linear(ks[4], ks[5], H2, OUT_F)
    g1, be1 = jnp.ones((H1,), jnp.float32), jnp.zeros((H1,), jnp.float32)
    m1, v1 = jnp.zeros((H1,), jnp.float32), jnp.ones((H1,), jnp.float32)
    g2, be2 = jnp.ones((H2,), jnp.float32), jnp.zeros((H2,), jnp.float32)
    m2, v2 = jnp.zeros((H2,), jnp.float32), jnp.ones((H2,), jnp.float32)
    return (w1, b1, g1, be1, m1, v1, w2, b2, g2, be2, m2, v2, w3, b3)


if __name__ == "__main__":
    key = jax.random.PRNGKey(0)
    k_params, k_x = jax.random.split(key)

    params = init_params(k_params)
    batch = 8
    x = jax.random.normal(k_x, (batch, IN_F), jnp.float32)

    # TODO(synk): training-mode Dropout(p=0.6) / batch-statistics BatchNorm not implemented; eval-mode only.
    logits = neural_network_forward(x, params)
    jax.block_until_ready(logits)
    assert logits.shape == (batch, OUT_F)

    ref = reference_forward(x, params)
    assert jnp.allclose(logits, ref, atol=5e-2, rtol=5e-2), (
        f"max abs diff {jnp.max(jnp.abs(logits - ref)):.4f}")
    print("KERNEL_OK")
</pallas_src>

<mosaic_0001>
module attributes {stable_mosaic.version = 11 : i64} {
  func.func @mlp_kernel(%arg0: i32, %arg1: memref<8x85xf32, #tpu.memory_space<vmem>>, %arg2: memref<85x128xbf16, #tpu.memory_space<vmem>>, %arg3: memref<1x128xf32, #tpu.memory_space<vmem>>, %arg4: memref<128x64xbf16, #tpu.memory_space<vmem>>, %arg5: memref<1x64xf32, #tpu.memory_space<vmem>>, %arg6: memref<64x8xbf16, #tpu.memory_space<vmem>>, %arg7: memref<1x8xf32, #tpu.memory_space<vmem>>, %arg8: memref<8x8xf32, #tpu.memory_space<vmem>>) attributes {dimension_semantics = [#tpu.dimension_semantics<parallel>], iteration_bounds = array<i64: 1>, scalar_prefetch = 0 : i64, scratch_operands = 0 : i64, tpu.core_type = #tpu.core_type<tc>, window_params = [{transform_indices = @transform_0, window_bounds = array<i64: 8, 85>}, {pipeline_mode = #tpu.pipeline_mode<synchronous>, transform_indices = @transform_1, window_bounds = array<i64: 85, 128>}, {pipeline_mode = #tpu.pipeline_mode<synchronous>, transform_indices = @transform_2, window_bounds = array<i64: 1, 128>}, {pipeline_mode = #tpu.pipeline_mode<synchronous>, transform_indices = @transform_3, window_bounds = array<i64: 128, 64>}, {pipeline_mode = #tpu.pipeline_mode<synchronous>, transform_indices = @transform_4, window_bounds = array<i64: 1, 64>}, {pipeline_mode = #tpu.pipeline_mode<synchronous>, transform_indices = @transform_5, window_bounds = array<i64: 64, 8>}, {pipeline_mode = #tpu.pipeline_mode<synchronous>, transform_indices = @transform_6, window_bounds = array<i64: 1, 8>}, {transform_indices = @transform_7, window_bounds = array<i64: 8, 8>}]} {
    %c0 = arith.constant 0 : index
    %c0_0 = arith.constant 0 : index
    %0 = vector.load %arg1[%c0, %c0_0] : memref<8x85xf32, #tpu.memory_space<vmem>>, vector<8x85xf32>
    %1 = arith.truncf %0 : vector<8x85xf32> to vector<8x85xbf16>
    %c0_1 = arith.constant 0 : index
    %c0_2 = arith.constant 0 : index
    %2 = vector.load %arg2[%c0_1, %c0_2] : memref<85x128xbf16, #tpu.memory_space<vmem>>, vector<85x128xbf16>
    %cst = arith.constant dense<0.000000e+00> : vector<8x128xf32>
    %3 = tpu.matmul %1, %2, %cst {dimension_numbers = #tpu.dot_dimension_numbers<[1], [0], [0], [1], [0, 0, 1, 1], [], []>} : vector<8x85xbf16>, vector<85x128xbf16>, vector<8x128xf32> -> vector<8x128xf32>
    %c0_3 = arith.constant 0 : index
    %c0_4 = arith.constant 0 : index
    %4 = vector.load %arg3[%c0_3, %c0_4] : memref<1x128xf32, #tpu.memory_space<vmem>>, vector<1x128xf32>
    %5 = vector.broadcast %4 : vector<1x128xf32> to vector<8x128xf32>
    %6 = arith.addf %3, %5 : vector<8x128xf32>
    %cst_5 = arith.constant 0.000000e+00 : f32
    %7 = vector.broadcast %cst_5 : f32 to vector<8x128xf32>
    %8 = arith.maximumf %6, %7 : vector<8x128xf32>
    %9 = arith.truncf %8 : vector<8x128xf32> to vector<8x128xbf16>
    %c0_6 = arith.constant 0 : index
    %c0_7 = arith.constant 0 : index
    %10 = vector.load %arg4[%c0_6, %c0_7] : memref<128x64xbf16, #tpu.memory_space<vmem>>, vector<128x64xbf16>
    %cst_8 = arith.constant dense<0.000000e+00> : vector<8x64xf32>
    %11 = tpu.matmul %9, %10, %cst_8 {dimension_numbers = #tpu.dot_dimension_numbers<[1], [0], [0], [1], [0, 0, 1, 1], [], []>} : vector<8x128xbf16>, vector<128x64xbf16>, vector<8x64xf32> -> vector<8x64xf32>
    %c0_9 = arith.constant 0 : index
    %c0_10 = arith.constant 0 : index
    %12 = vector.load %arg5[%c0_9, %c0_10] : memref<1x64xf32, #tpu.memory_space<vmem>>, vector<1x64xf32>
    %13 = vector.broadcast %12 : vector<1x64xf32> to vector<8x64xf32>
    %14 = arith.addf %11, %13 : vector<8x64xf32>
    %cst_11 = arith.constant 0.000000e+00 : f32
    %15 = vector.broadcast %cst_11 : f32 to vector<8x64xf32>
    %16 = arith.maximumf %14, %15 : vector<8x64xf32>
    %17 = arith.truncf %16 : vector<8x64xf32> to vector<8x64xbf16>
    %c0_12 = arith.constant 0 : index
    %c0_13 = arith.constant 0 : index
    %18 = vector.load %arg6[%c0_12, %c0_13] : memref<64x8xbf16, #tpu.memory_space<vmem>>, vector<64x8xbf16>
    %cst_14 = arith.constant dense<0.000000e+00> : vector<8x8xf32>
    %19 = tpu.matmul %17, %18, %cst_14 {dimension_numbers = #tpu.dot_dimension_numbers<[1], [0], [0], [1], [0, 0, 1, 1], [], []>} : vector<8x64xbf16>, vector<64x8xbf16>, vector<8x8xf32> -> vector<8x8xf32>
    %c0_15 = arith.constant 0 : index
    %c0_16 = arith.constant 0 : index
    %20 = vector.load %arg7[%c0_15, %c0_16] : memref<1x8xf32, #tpu.memory_space<vmem>>, vector<1x8xf32>
    %21 = vector.broadcast %20 : vector<1x8xf32> to vector<8x8xf32>
    %22 = arith.addf %19, %21 : vector<8x8xf32>
    %c0_17 = arith.constant 0 : index
    %c0_18 = arith.constant 0 : index
    %23 = vector.load %arg8[%c0_17, %c0_18] : memref<8x8xf32, #tpu.memory_space<vmem>>, vector<8x8xf32>
    tpu.vector_store %arg8[%c0_17, %c0_18], %22 {strides = array<i32>} : memref<8x8xf32, #tpu.memory_space<vmem>>, vector<8x8xf32>,
    return
  }
  func.func @transform_0(%arg0: i32) -> (i32, i32) {
    %c0_i32 = arith.constant 0 : i32
    %c0_i32_0 = arith.constant 0 : i32
    return %arg0, %c0_i32 : i32, i32
  }
  func.func @transform_1(%arg0: i32) -> (i32, i32) {
    %c0_i32 = arith.constant 0 : i32
    %c0_i32_0 = arith.constant 0 : i32
    %c0_i32_1 = arith.constant 0 : i32
    return %c0_i32, %c0_i32_0 : i32, i32
  }
  func.func @transform_2(%arg0: i32) -> (i32, i32) {
    %c0_i32 = arith.constant 0 : i32
    %c0_i32_0 = arith.constant 0 : i32
    %c0_i32_1 = arith.constant 0 : i32
    return %c0_i32, %c0_i32_0 : i32, i32
  }
  func.func @transform_3(%arg0: i32) -> (i32, i32) {
    %c0_i32 = arith.constant 0 : i32
    %c0_i32_0 = arith.constant 0 : i32
    %c0_i32_1 = arith.constant 0 : i32
    return %c0_i32, %c0_i32_0 : i32, i32
  }
  func.func @transform_4(%arg0: i32) -> (i32, i32) {
    %c0_i32 = arith.constant 0 : i32
    %c0_i32_0 = arith.constant 0 : i32
    %c0_i32_1 = arith.constant 0 : i32
    return %c0_i32, %c0_i32_0 : i32, i32
  }
  func.func @transform_5(%arg0: i32) -> (i32, i32) {
    %c0_i32 = arith.constant 0 : i32
    %c0_i32_0 = arith.constant 0 : i32
    %c0_i32_1 = arith.constant 0 : i32
    return %c0_i32, %c0_i32_0 : i32, i32
  }
  func.func @transform_6(%arg0: i32) -> (i32, i32) {
    %c0_i32 = arith.constant 0 : i32
    %c0_i32_0 = arith.constant 0 : i32
    %c0_i32_1 = arith.constant 0 : i32
    return %c0_i32, %c0_i32_0 : i32, i32
  }
  func.func @transform_7(%arg0: i32) -> (i32, i32) {
    %c0_i32 = arith.constant 0 : i32
    %c0_i32_0 = arith.constant 0 : i32
    return %arg0, %c0_i32 : i32, i32
  }
}

</mosaic_0001>

<llo_original>
// kernel: tpu_custom_call.1
$region0: #{tpu_custom_call.1}
  #allocation0 [shape = 'u32[]', space=smem, size = 0x4, offset = 0x4, fixed_abs, tag = 'smem constant byte address 0x4 - core index']
  #allocation1 [shape = 'u32[144,128]{1,0:T(1,128)}', space=vmem, size = 0x12000, scoped, tag = 'internal scratch']
  %s0 = inlined_call_operand.vmem [shape: f32[8,85], index: 0, kind: input, shape index: {}]
  %s1 = inlined_call_operand.vmem [shape: bf16[85,128], index: 1, kind: input, shape index: {}]
  %s2 = inlined_call_operand.vmem [shape: f32[1,128], index: 2, kind: input, shape index: {}]
  %s3 = inlined_call_operand.vmem [shape: bf16[128,64], index: 3, kind: input, shape index: {}]
  %s4 = inlined_call_operand.vmem [shape: f32[1,64], index: 4, kind: input, shape index: {}]
  %s5 = inlined_call_operand.vmem [shape: bf16[64,8], index: 5, kind: input, shape index: {}]
  %s6 = inlined_call_operand.vmem [shape: f32[1,8], index: 6, kind: input, shape index: {}]
  %s7 = inlined_call_operand.hbm [shape: f32[8,8], index: 7, kind: output, shape index: {}]
  %s8 = sld [smem:[#allocation0]]
  $region38: #{tpu_custom_call.1} parent=0
    _
  %s10 = ssub.s32 1, %s8
  %s11 = scalar_select 0, %s10, %s8
  $region1: #{tpu_custom_call.1} parent=0
    #allocation2 [shape = 'u8[4096]{0}', space=vmem, size = 0x1000, scoped, tag = 'output window, operand 0, single buffered']
    #allocation3 [shape = 's32[1]{0}', space=sflag, size = 0x4, scoped, tag = 'scoped memory for tpu_custom_call.1']
    %12 = vsyncpa [#allocation3], 0
    // Predicated region
    $region2: #{tpu_custom_call.1} parent=1 // pred_check
      _
    $region3: #{tpu_custom_call.1} parent=1 // pred_check_branch
      %14 = sbr.rel (0) target = $region5
    $region4: #{tpu_custom_call.1} parent=1 // pred_region
      _
    $region5: #{tpu_custom_call.1} parent=1 // pred_fallthru
      _
    // Predicated region
    $region6: #{tpu_custom_call.1} parent=1 // pred_check
      _
    $region7: #{tpu_custom_call.1} parent=1 // pred_check_branch
      %16 = sbr.rel (0) target = $region9
    $region8: #{tpu_custom_call.1} parent=1 // pred_region
      _
    $region9: #{tpu_custom_call.1} parent=1 // pred_fallthru
      _
    // Predicated region
    $region10: #{tpu_custom_call.1} parent=1 // pred_check
      _
    $region11: #{tpu_custom_call.1} parent=1 // pred_check_branch
      %18 = sbr.rel (0) target = $region13
    $region12: #{tpu_custom_call.1} parent=1 // pred_region
      _
    $region13: #{tpu_custom_call.1} parent=1 // pred_fallthru
      _
    // Predicated region
    $region14: #{tpu_custom_call.1} parent=1 // pred_check
      _
    $region15: #{tpu_custom_call.1} parent=1 // pred_check_branch
      %20 = sbr.rel (0) target = $region17
    $region16: #{tpu_custom_call.1} parent=1 // pred_region
      _
    $region17: #{tpu_custom_call.1} parent=1 // pred_fallthru
      _
    // Predicated region
    $region18: #{tpu_custom_call.1} parent=1 // pred_check
      _
    $region19: #{tpu_custom_call.1} parent=1 // pred_check_branch
      %22 = sbr.rel (0) target = $region21
    $region20: #{tpu_custom_call.1} parent=1 // pred_region
      _
    $region21: #{tpu_custom_call.1} parent=1 // pred_fallthru
      _
    // Predicated region
    $region22: #{tpu_custom_call.1} parent=1 // pred_check
      _
    $region23: #{tpu_custom_call.1} parent=1 // pred_check_branch
      %24 = sbr.rel (0) target = $region25
    $region24: #{tpu_custom_call.1} parent=1 // pred_region
      _
    $region25: #{tpu_custom_call.1} parent=1 // pred_fallthru
      _
    // Predicated region
    $region26: #{tpu_custom_call.1} parent=1 // pred_check
      _
    $region27: #{tpu_custom_call.1} parent=1 // pred_check_branch
      %26 = sbr.rel (0) target = $region29
    $region28: #{tpu_custom_call.1} parent=1 // pred_region
      _
    $region29: #{tpu_custom_call.1} parent=1 // pred_fallthru
      _
    %v28 = vld [vmem:[%s0] sm:$0xff]
    %v29 = vpack.c.bf16 %v28, %v28
    %v30 = vld [vmem:[%s1] sm:$0xf]
    %v31 = vld [vmem:[%s1 + $0x4] sm:$0xf]
    %v32 = vld [vmem:[%s1 + $0x8] sm:$0xf]
    %v33 = vld [vmem:[%s1 + $0xc] sm:$0xf]
    %v34 = vld [vmem:[%s1 + $0x10] sm:$0xf]
    %v35 = vld [vmem:[%s1 + $0x14] sm:$0xf]
    %v36 = vld [vmem:[%s1 + $0x18] sm:$0xf]
    %v37 = vld [vmem:[%s1 + $0x1c] sm:$0xf]
    %v38 = vld [vmem:[%s1 + $0x20] sm:$0xf]
    %v39 = vld [vmem:[%s1 + $0x24] sm:$0xf]
    %v40 = vld [vmem:[%s1 + $0x28] sm:$0x7]
    %v41 = vld [vmem:[%s2] sm:$0x1]
    %v43 = vlaneseq
    %v44 = vshrl.u32 %v43, 7
    %v45 = vsub.s32 0, %v44
    %v46 = vrot.slane %v41, %v45
    %v59 = vunpack.c.l.b16 %v30
    %v60 = vunpack.c.l.b16 %v31
    %v61 = vunpack.c.l.b16 %v32
    %v62 = vunpack.c.l.b16 %v33
    %v63 = vunpack.c.l.b16 %v34
    %v64 = vunpack.c.l.b16 %v35
    %v65 = vunpack.c.l.b16 %v36
    %v66 = vunpack.c.l.b16 %v37
    %v67 = vunpack.c.l.b16 %v38
    %v68 = vunpack.c.l.b16 %v39
    %v69 = vunpack.c.l.b16 %v40
    %v70 = vpack.c.b16 %v60, %v59
    %v71 = vpack.c.b16 %v62, %v61
    %v72 = vpack.c.b16 %v64, %v63
    %v73 = vpack.c.b16 %v66, %v65
    %v74 = vpack.c.b16 %v68, %v67
    %v75 = vpack.c.b16 %v69, %v69
    %vm81 = vcmask 695296
    %v83 = vsel %vm81, %v29, 0
    %vm85 = vcmask 1041408
    %vm86 = vcmask 1042432
    %v87 = vsel %vm85, 4294967295, 65535
    %v88 = vsel %vm86, %v87, 0
    %v90 = vand.u32 %v75, %v88
    %92 = vmatprep.subr.bf16.mxu0 0
    %93 = vmatpush1.bf16.msra.mxu0 0
    %94 = vmatprep.subr.bf16.mxu0 0
    %95 = vmatpush1.bf16.msra.mxu0 0
    %96 = vmatprep.subr.bf16.mxu0 0
    %97 = vmatpush1.bf16.msra.mxu0 %v90
    %98 = vmatprep.subr.bf16.mxu0 0
    %99 = vmatpush1.bf16.msra.mxu0 %v74
    %100 = vmatprep.subr.bf16.mxu0 0
    %101 = vmatpush1.bf16.msra.mxu0 %v73
    %102 = vmatprep.subr.bf16.mxu0 0
    %103 = vmatpush1.bf16.msra.mxu0 %v72
    %104 = vmatprep.subr.bf16.mxu0 0
    %105 = vmatpush1.bf16.msra.mxu0 %v71
    %106 = vmatprep.subr.bf16.mxu0 0
    %107 = vmatpush1.bf16.msra.mxu0 %v70
    %108 = vmatprep.subr.bf16.mxu0 0
    %109 = vmatpush2.bf16.msra.mxu0 0
    %110 = vmatprep.subr.bf16.mxu0 0
    %111 = vmatpush2.bf16.msra.mxu0 0
    %112 = vmatprep.subr.bf16.mxu0 0
    %113 = vmatpush2.bf16.msra.mxu0 0
    %114 = vmatprep.subr.bf16.mxu0 0
    %115 = vmatpush2.bf16.msra.mxu0 0
    %116 = vmatprep.subr.bf16.mxu0 0
    %117 = vmatpush2.bf16.msra.mxu0 0
    %118 = vmatprep.subr.bf16.mxu0 0
    %119 = vmatpush2.bf16.msra.mxu0 0
    %120 = vmatprep.subr.bf16.mxu0 0
    %121 = vmatpush2.bf16.msra.mxu0 0
    %122 = vmatprep.subr.bf16.mxu0 0
    %123 = vmatpush2.bf16.msra.mxu0 0
    %124 = vmatprep.mubr.bf16.mxu0 0
    %125 = vmatmul.mubr.bf16.gmra.mxu0 %v83
    %v126 = vpop.f32.mrf.mxu0
    %v127 = vadd.f32 %v46, %v126
    %v128 = vpop.f32.mrf.mxu0
    %v129 = vpop.f32.mrf.mxu0
    %v130 = vpop.f32.mrf.mxu0
    %131 = vdwg.mxu0
    %v132 = vmax.f32 %v127, 0.0
    %v133 = vpack.c.bf16 %v132, %v132
    %v134 = vld [vmem:[%s3] sm:$0xf]
    %v135 = vld [vmem:[%s3 + $0x4] sm:$0xf]
    %v136 = vld [vmem:[%s3 + $0x8] sm:$0xf]
    %v137 = vld [vmem:[%s3 + $0xc] sm:$0xf]
    %v138 = vld [vmem:[%s3 + $0x10] sm:$0xf]
    %v139 = vld [vmem:[%s3 + $0x14] sm:$0xf]
    %v140 = vld [vmem:[%s3 + $0x18] sm:$0xf]
    %v141 = vld [vmem:[%s3 + $0x1c] sm:$0xf]
    %v142 = vld [vmem:[%s3 + $0x20] sm:$0xf]
    %v143 = vld [vmem:[%s3 + $0x24] sm:$0xf]
    %v144 = vld [vmem:[%s3 + $0x28] sm:$0xf]
    %v145 = vld [vmem:[%s3 + $0x2c] sm:$0xf]
    %v146 = vld [vmem:[%s3 + $0x30] sm:$0xf]
    %v147 = vld [vmem:[%s3 + $0x34] sm:$0xf]
    %v148 = vld [vmem:[%s3 + $0x38] sm:$0xf]
    %v149 = vld [vmem:[%s3 + $0x3c] sm:$0xf]
    %v150 = vld [vmem:[%s4] sm:$0x1]
    %v152 = vlaneseq
    %v153 = vshrl.u32 %v152, 7
    %v154 = vsub.s32 0, %v153
    %v155 = vrot.slane %v150, %v154
    %v173 = vunpack.c.l.b16 %v134
    %v174 = vunpack.c.l.b16 %v135
    %v175 = vunpack.c.l.b16 %v136
    %v176 = vunpack.c.l.b16 %v137
    %v177 = vunpack.c.l.b16 %v138
    %v178 = vunpack.c.l.b16 %v139
    %v179 = vunpack.c.l.b16 %v140
    %v180 = vunpack.c.l.b16 %v141
    %v181 = vunpack.c.l.b16 %v142
    %v182 = vunpack.c.l.b16 %v143
    %v183 = vunpack.c.l.b16 %v144
    %v184 = vunpack.c.l.b16 %v145
    %v185 = vunpack.c.l.b16 %v146
    %v186 = vunpack.c.l.b16 %v147
    %v187 = vunpack.c.l.b16 %v148
    %v188 = vunpack.c.l.b16 %v149
    %v189 = vpack.c.b16 %v174, %v173
    %v190 = vpack.c.b16 %v176, %v175
    %v191 = vpack.c.b16 %v178, %v177
    %v192 = vpack.c.b16 %v180, %v179
    %v193 = vpack.c.b16 %v182, %v181
    %v194 = vpack.c.b16 %v184, %v183
    %v195 = vpack.c.b16 %v186, %v185
    %v196 = vpack.c.b16 %v188, %v187
    %205 = vmatprep.subr.bf16.mxu0 0
    %206 = vmatpush1.bf16.msra.mxu0 %v196
    %207 = vmatprep.subr.bf16.mxu0 0
    %208 = vmatpush1.bf16.msra.mxu0 %v195
    %209 = vmatprep.subr.bf16.mxu0 0
    %210 = vmatpush1.bf16.msra.mxu0 %v194
    %211 = vmatprep.subr.bf16.mxu0 0
    %212 = vmatpush1.bf16.msra.mxu0 %v193
    %213 = vmatprep.subr.bf16.mxu0 0
    %214 = vmatpush1.bf16.msra.mxu0 %v192
    %215 = vmatprep.subr.bf16.mxu0 0
    %216 = vmatpush1.bf16.msra.mxu0 %v191
    %217 = vmatprep.subr.bf16.mxu0 0
    %218 = vmatpush1.bf16.msra.mxu0 %v190
    %219 = vmatprep.subr.bf16.mxu0 0
    %220 = vmatpush1.bf16.msra.mxu0 %v189
    %221 = vmatprep.subr.bf16.mxu0 0
    %222 = vmatpush2.bf16.msra.mxu0 0
    %223 = vmatprep.subr.bf16.mxu0 0
    %224 = vmatpush2.bf16.msra.mxu0 0
    %225 = vmatprep.subr.bf16.mxu0 0
    %226 = vmatpush2.bf16.msra.mxu0 0
    %227 = vmatprep.subr.bf16.mxu0 0
    %228 = vmatpush2.bf16.msra.mxu0 0
    %229 = vmatprep.subr.bf16.mxu0 0
    %230 = vmatpush2.bf16.msra.mxu0 0
    %231 = vmatprep.subr.bf16.mxu0 0
    %232 = vmatpush2.bf16.msra.mxu0 0
    %233 = vmatprep.subr.bf16.mxu0 0
    %234 = vmatpush2.bf16.msra.mxu0 0
    %235 = vmatprep.subr.bf16.mxu0 0
    %236 = vmatpush2.bf16.msra.mxu0 0
    %237 = vmatprep.mubr.bf16.mxu0 0
    %238 = vmatmul.mubr.bf16.gmra.mxu0 %v133
    %v239 = vpop.f32.mrf.mxu0
    %v240 = vadd.f32 %v155, %v239
    %v241 = vpop.f32.mrf.mxu0
    %v242 = vpop.f32.mrf.mxu0
    %v243 = vpop.f32.mrf.mxu0
    %244 = vdwg.mxu0
    %v245 = vmax.f32 %v240, 0.0
    %v246 = vpack.c.bf16 %v245, %v245
    %v247 = vld [vmem:[%s5] sm:$0xf]
    %v248 = vld [vmem:[%s5 + $0x4] sm:$0xf]
    %v249 = vld [vmem:[%s5 + $0x8] sm:$0xf]
    %v250 = vld [vmem:[%s5 + $0xc] sm:$0xf]
    %v251 = vld [vmem:[%s5 + $0x10] sm:$0xf]
    %v252 = vld [vmem:[%s5 + $0x14] sm:$0xf]
    %v253 = vld [vmem:[%s5 + $0x18] sm:$0xf]
    %v254 = vld [vmem:[%s5 + $0x1c] sm:$0xf]
    %v255 = vld [vmem:[%s6] sm:$0x1]
    %v257 = vlaneseq
    %v258 = vshrl.u32 %v257, 7
    %v259 = vsub.s32 0, %v258
    %v260 = vrot.slane %v255, %v259
    %v270 = vunpack.c.l.b16 %v247
    %v271 = vunpack.c.l.b16 %v248
    %v272 = vunpack.c.l.b16 %v249
    %v273 = vunpack.c.l.b16 %v250
    %v274 = vunpack.c.l.b16 %v251
    %v275 = vunpack.c.l.b16 %v252
    %v276 = vunpack.c.l.b16 %v253
    %v277 = vunpack.c.l.b16 %v254
    %v278 = vpack.c.b16 %v271, %v270
    %v279 = vpack.c.b16 %v273, %v272
    %v280 = vpack.c.b16 %v275, %v274
    %v281 = vpack.c.b16 %v277, %v276
    %vm286 = vcmask 523264
    %v288 = vsel %vm286, %v246, 0
    %290 = vmatprep.subr.bf16.mxu0 0
    %291 = vmatpush1.bf16.msra.mxu0 0
    %292 = vmatprep.subr.bf16.mxu0 0
    %293 = vmatpush1.bf16.msra.mxu0 0
    %294 = vmatprep.subr.bf16.mxu0 0
    %295 = vmatpush1.bf16.msra.mxu0 0
    %296 = vmatprep.subr.bf16.mxu0 0
    %297 = vmatpush1.bf16.msra.mxu0 0
    %298 = vmatprep.subr.bf16.mxu0 0
    %299 = vmatpush1.bf16.msra.mxu0 %v281
    %300 = vmatprep.subr.bf16.mxu0 0
    %301 = vmatpush1.bf16.msra.mxu0 %v280
    %302 = vmatprep.subr.bf16.mxu0 0
    %303 = vmatpush1.bf16.msra.mxu0 %v279
    %304 = vmatprep.subr.bf16.mxu0 0
    %305 = vmatpush1.bf16.msra.mxu0 %v278
    %306 = vmatprep.subr.bf16.mxu0 0
    %307 = vmatpush2.bf16.msra.mxu0 0
    %308 = vmatprep.subr.bf16.mxu0 0
    %309 = vmatpush2.bf16.msra.mxu0 0
    %310 = vmatprep.subr.bf16.mxu0 0
    %311 = vmatpush2.bf16.msra.mxu0 0
    %312 = vmatprep.subr.bf16.mxu0 0
    %313 = vmatpush2.bf16.msra.mxu0 0
    %314 = vmatprep.subr.bf16.mxu0 0
    %315 = vmatpush2.bf16.msra.mxu0 0
    %316 = vmatprep.subr.bf16.mxu0 0
    %317 = vmatpush2.bf16.msra.mxu0 0
    %318 = vmatprep.subr.bf16.mxu0 0
    %319 = vmatpush2.bf16.msra.mxu0 0
    %320 = vmatprep.subr.bf16.mxu0 0
    %321 = vmatpush2.bf16.msra.mxu0 0
    %322 = vmatprep.mubr.bf16.mxu0 0
    %323 = vmatmul.mubr.bf16.gmra.mxu0 %v288
    %v324 = vpop.f32.mrf.mxu0
    %v325 = vadd.f32 %v260, %v324
    %v326 = vpop.f32.mrf.mxu0
    %v327 = vpop.f32.mrf.mxu0
    %v328 = vpop.f32.mrf.mxu0
    %329 = vdwg.mxu0
    %vm330 = vcmask 64512
    %331 = vst.msk [vmem:[#allocation2] sm:$0xff] %vm330, %v325
    // Predicated region
    $region30: #{tpu_custom_call.1} parent=1 // pred_check
      _
    $region31: #{tpu_custom_call.1} parent=1 // pred_check_branch
      %333 = sbr.rel (0) target = $region33
    $region32: #{tpu_custom_call.1} parent=1 // pred_region
      %s335 = ssub.s32 128, 128
      %336 = vsyncadd [#allocation3], %s335
      %s338 = sshll.u32 [#allocation2], 4
      %s339 = int_to_ptr.vmem [resolvable:$true] %s338
      %341 = dma.vmem_to_hbm [thread:$0]  %s339, 128, %s7, [#allocation3]
    $region33: #{tpu_custom_call.1} parent=1 // pred_fallthru
      _
    // Predicated region
    $region34: #{tpu_custom_call.1} parent=1 // pred_check
      _
    $region35: #{tpu_custom_call.1} parent=1 // pred_check_branch
      %343 = sbr.rel (0) target = $region37
    $region36: #{tpu_custom_call.1} parent=1 // pred_region
      %344 = dma.done [#allocation3], 128
    $region37: #{tpu_custom_call.1} parent=1 // pred_fallthru
      _
    %345 = vsyncpa [#allocation3], 1

</llo_original>
